<compile_context>
chip_gen: v7x
topology: tpu7x:2x2x1
jax: 0.10.0
libtpu: 0.0.40
codegen_flags: <defaults>
</compile_context>

<pallas_src>
import jax
import jax.numpy as jnp
from jax import lax
from jax.experimental import pallas as pl
from jax.experimental.pallas import tpu as pltpu


def _round_up(x, m):
    return ((x + m - 1) // m) * m


def _matmul_kernel(x_ref, w_ref, o_ref):
    # x_ref: (TM, K_pad) im2col rows; w_ref: (K_pad, C_out_pad) resident weight;
    # o_ref: (TM, C_out_pad) lane-dense output. One MXU matmul, dense store.
    o_ref[...] = jnp.dot(
        x_ref[...], w_ref[...], preferred_element_type=jnp.float32
    ).astype(o_ref.dtype)


def _matmul_acc_kernel(x_ref, w_ref, o_ref, acc_ref):
    # K-tiled fallback for large K*C_out: accumulate over the (arbitrary) K grid
    # axis into an f32 VMEM scratch, store once on the last K step.
    k = pl.program_id(1)

    @pl.when(k == 0)
    def _():
        acc_ref[...] = jnp.zeros_like(acc_ref)

    acc_ref[...] += jnp.dot(x_ref[...], w_ref[...],
                            preferred_element_type=jnp.float32)

    @pl.when(k == pl.num_programs(1) - 1)
    def _():
        o_ref[...] = acc_ref[...].astype(o_ref.dtype)


def _vmem_limit_bytes():
    """Generation-aware VMEM limit: ~100 MiB on v5e/v6e (128 MiB physical),
    48 MiB on v7x (64 MiB physical). Conservative default if the query fails."""
    phys = 64 * 1024 * 1024
    try:
        phys = int(getattr(pltpu.get_tpu_info(), "vmem_capacity_bytes", phys))
    except Exception:
        pass
    return min(100 * 1024 * 1024, max(16 * 1024 * 1024, phys - 16 * 1024 * 1024))


def basic_conv2d(x_nchw, weight_oihw, stride, padding, *,
                 compute_dtype=jnp.bfloat16, tm=None, force_k_tiling=False):
    """Equivalent of BasicConv2d.forward: Conv2d(..., bias=False), NCHW / OIHW.

    compute_dtype: MXU operand dtype (bf16 default on every TPU generation —
    bf16-native MXU + half the DMA bytes; pass jnp.float32 for strict numerics).
    Accumulation is always f32. force_k_tiling is a testing knob for the
    K-tiled accumulator path.
    """
    N, C_in, H, W = x_nchw.shape
    C_out, C_in_w, KH, KW = weight_oihw.shape
    assert C_in == C_in_w
    sH, sW = (stride, stride) if isinstance(stride, int) else tuple(stride)
    pH, pW = (padding, padding) if isinstance(padding, int) else tuple(padding)

    op_dtype = (jnp.dtype(compute_dtype) if compute_dtype is not None
                else jnp.dtype(x_nchw.dtype))
    op_size = op_dtype.itemsize
    # bf16 path writes the (lane-padded) output block in bf16 -> half the store
    # traffic; cast back to the input dtype at the very end.
    out_dtype = op_dtype
    out_size = jnp.dtype(out_dtype).itemsize
    sublane = 16 if op_size < 4 else 8          # (8,128) f32 / (16,128) bf16 tiling

    # ---- wrapper-side layout plumbing (plain XLA, outside the kernel) ----
    x_nhwc = jnp.transpose(x_nchw, (0, 2, 3, 1))
    x_pad = jnp.pad(x_nhwc, ((0, 0), (pH, pH), (pW, pW), (0, 0)))
    H_p, W_p = H + 2 * pH, W + 2 * pW
    OH = (H_p - KH) // sH + 1
    OW = (W_p - KW) // sW + 1

    # im2col: one (possibly strided) slice per kernel tap -> (M, K) slab.
    # Stride handling lives here, never as strided access inside the kernel.
    # TODO(synk): for C_in >= ~128 skip the KH*KW x im2col HBM blow-up and
    # accumulate per-tap matmuls in-kernel from the padded NHWC tile instead.
    taps = []
    for kh in range(KH):
        for kw in range(KW):
            taps.append(lax.slice(
                x_pad,
                (0, kh, kw, 0),
                (N, kh + (OH - 1) * sH + 1, kw + (OW - 1) * sW + 1, C_in),
                (1, sH, sW, 1)))                       # (N, OH, OW, C_in)
    K = KH * KW * C_in
    M = N * OH * OW
    x2 = jnp.stack(taps, axis=3).reshape(M, K)         # K ordering = (kh, kw, c_in)
    w2 = jnp.transpose(weight_oihw, (2, 3, 1, 0)).reshape(K, C_out)

    C_out_pad = _round_up(C_out, 128)                  # lane-dense output

    # ---- generation-aware tile / VMEM planning ----
    vmem_limit = _vmem_limit_bytes()
    budget = int(0.75 * vmem_limit)                    # leave Mosaic headroom
    if tm is None:
        # v5e/v6e can afford 1024-row tiles; v7x (64 MiB VMEM) caps at 512.
        tm = 512 if vmem_limit <= 48 * 1024 * 1024 else 1024
    tm = _round_up(max(sublane, int(tm)), sublane)     # keep (8,128)-legal
    tm = min(tm, _round_up(M, sublane))                # never pad tiny M up to tm

    K_pad = _round_up(K, sublane)                      # unmasked sublane accesses
    grid_m = _round_up(M, tm) // tm
    # Triple-buffer the x slab when per-step matmuls are tiny and the grid is long.
    x_nbuf = 3 if (grid_m >= 8 and tm * K_pad * op_size <= 2 * 1024 * 1024) else 2

    single_pass_bytes = (K_pad * C_out_pad * op_size          # weight (Buffered(1))
                         + tm * K_pad * op_size * x_nbuf      # x tiles
                         + tm * C_out_pad * out_size * 2)     # out tiles
    use_k_tiling = bool(force_k_tiling) or single_pass_bytes > budget

    if use_k_tiling:
        tk = min(512, _round_up(K, 128))

        def _tiled_bytes(tm_):
            return (tk * C_out_pad * op_size * 2 + tm_ * tk * op_size * 2
                    + tm_ * C_out_pad * out_size * 2 + tm_ * C_out_pad * 4)

        while _tiled_bytes(tm) > budget and tm > sublane:
            tm = max(sublane, _round_up(tm // 2, sublane))
        K_pad = _round_up(K, tk)

    M_pad = _round_up(M, tm)
    # Zero padding: extra K columns/rows contribute 0, extra M rows are sliced off.
    x2 = jnp.pad(x2, ((0, M_pad - M), (0, K_pad - K))).astype(op_dtype)
    w2 = jnp.pad(w2, ((0, K_pad - K), (0, C_out_pad - C_out))).astype(op_dtype)

    cost = pl.CostEstimate(
        flops=2 * M_pad * K_pad * C_out_pad,
        transcendentals=0,
        bytes_accessed=(x2.size * op_size + w2.size * op_size
                        + M_pad * C_out_pad * out_size))

    if not use_k_tiling:
        out = pl.pallas_call(
            _matmul_kernel,
            out_shape=jax.ShapeDtypeStruct((M_pad, C_out_pad), out_dtype),
            grid_spec=pl.GridSpec(
                grid=(M_pad // tm,),                   # batch+spatial folded into M
                in_specs=[
                    pl.BlockSpec((tm, K_pad), lambda i: (i, 0),
                                 pipeline_mode=pl.Buffered(x_nbuf)),
                    # Constant index_map: keep ONE resident copy, not two.
                    pl.BlockSpec((K_pad, C_out_pad), lambda i: (0, 0),
                                 pipeline_mode=pl.Buffered(1)),
                ],
                out_specs=pl.BlockSpec((tm, C_out_pad), lambda i: (i, 0)),
            ),
            compiler_params=pltpu.CompilerParams(
                dimension_semantics=("parallel",),     # independent M tiles
                vmem_limit_bytes=vmem_limit,
            ),
            cost_estimate=cost,
        )(x2, w2)
    else:
        out = pl.pallas_call(
            _matmul_acc_kernel,
            out_shape=jax.ShapeDtypeStruct((M_pad, C_out_pad), out_dtype),
            grid_spec=pltpu.PrefetchScalarGridSpec(
                num_scalar_prefetch=0,
                grid=(M_pad // tm, K_pad // tk),       # reduction axis last
                in_specs=[
                    pl.BlockSpec((tm, tk), lambda i, k: (i, k)),
                    pl.BlockSpec((tk, C_out_pad), lambda i, k: (k, 0)),
                ],
                out_specs=pl.BlockSpec((tm, C_out_pad), lambda i, k: (i, 0)),
                scratch_shapes=[pltpu.VMEM((tm, C_out_pad), jnp.float32)],
            ),
            compiler_params=pltpu.CompilerParams(
                dimension_semantics=("parallel", "arbitrary"),
                vmem_limit_bytes=vmem_limit,
            ),
            cost_estimate=cost,
        )(x2, w2)

    out = out[:M, :C_out].reshape(N, OH, OW, C_out)
    out = jnp.transpose(out, (0, 3, 1, 2))             # back to NCHW
    return out.astype(x_nchw.dtype)


if __name__ == "__main__":
    # BasicConv2d(in_channels=4, out_channels=8, kernel_size=3, stride=1, padding=1)
    in_channels, out_channels = 4, 8
    kernel_size, stride, padding = 3, 1, 1
    N, H, W = 2, 16, 16

    key = jax.random.PRNGKey(0)
    kx, kw, kx2, kw2 = jax.random.split(key, 4)
    x = jax.random.normal(kx, (N, in_channels, H, W), dtype=jnp.float32)
    # Deterministic Conv2d weight, PyTorch OIHW layout, bias=False.
    weight = jax.random.normal(
        kw, (out_channels, in_channels, kernel_size, kernel_size),
        dtype=jnp.float32) * 0.1

    ref = lax.conv_general_dilated(
        x, weight,
        window_strides=(stride, stride),
        padding=((padding, padding), (padding, padding)),
        dimension_numbers=("NCHW", "OIHW", "NCHW"))

    # f32 operand path (single-pass kernel): tight tolerance vs XLA conv.
    out_f32 = jax.block_until_ready(
        basic_conv2d(x, weight, stride, padding, compute_dtype=jnp.float32))
    assert out_f32.shape == ref.shape
    assert jnp.max(jnp.abs(out_f32 - ref)) < 1e-4

    # Default bf16-operand / bf16-store path (f32 accumulation): looser tolerance.
    out_bf16 = jax.block_until_ready(basic_conv2d(x, weight, stride, padding))
    assert jnp.max(jnp.abs(out_bf16 - ref)) < 5e-2

    # Exercise the K-tiled accumulator fallback (2 K steps) on a deeper layer.
    x_deep = jax.random.normal(kx2, (1, 64, 8, 8), dtype=jnp.float32)
    w_deep = jax.random.normal(kw2, (32, 64, 3, 3), dtype=jnp.float32) * 0.05
    ref_deep = lax.conv_general_dilated(
        x_deep, w_deep, window_strides=(1, 1), padding=((1, 1), (1, 1)),
        dimension_numbers=("NCHW", "OIHW", "NCHW"))
    out_deep = jax.block_until_ready(
        basic_conv2d(x_deep, w_deep, 1, 1, compute_dtype=jnp.float32,
                     force_k_tiling=True))
    assert out_deep.shape == ref_deep.shape
    assert jnp.max(jnp.abs(out_deep - ref_deep)) < 5e-3

    print("KERNEL_OK")
</pallas_src>

<mosaic_0001>
module attributes {stable_mosaic.version = 11 : i64} {
  func.func @_matmul_kernel(%arg0: i32, %arg1: memref<512x40xf32, #tpu.memory_space<vmem>>, %arg2: memref<40x128xf32, #tpu.memory_space<vmem>>, %arg3: memref<512x128xf32, #tpu.memory_space<vmem>>) attributes {dimension_semantics = [#tpu.dimension_semantics<parallel>], iteration_bounds = array<i64: 1>, scalar_prefetch = 0 : i64, scratch_operands = 0 : i64, tpu.core_type = #tpu.core_type<tc>, window_params = [{pipeline_mode = #tpu.pipeline_mode<double_buffered>, transform_indices = @transform_0, window_bounds = array<i64: 512, 40>}, {pipeline_mode = #tpu.pipeline_mode<synchronous>, transform_indices = @transform_1, window_bounds = array<i64: 40, 128>}, {transform_indices = @transform_2, window_bounds = array<i64: 512, 128>}]} {
    %c0 = arith.constant 0 : index
    %c0_0 = arith.constant 0 : index
    %0 = vector.load %arg1[%c0, %c0_0] : memref<512x40xf32, #tpu.memory_space<vmem>>, vector<512x40xf32>
    %c0_1 = arith.constant 0 : index
    %c0_2 = arith.constant 0 : index
    %1 = vector.load %arg2[%c0_1, %c0_2] : memref<40x128xf32, #tpu.memory_space<vmem>>, vector<40x128xf32>
    %cst = arith.constant dense<0.000000e+00> : vector<512x128xf32>
    %2 = tpu.matmul %0, %1, %cst {dimension_numbers = #tpu.dot_dimension_numbers<[1], [0], [0], [1], [0, 0, 1, 1], [], []>} : vector<512x40xf32>, vector<40x128xf32>, vector<512x128xf32> -> vector<512x128xf32>
    %c0_3 = arith.constant 0 : index
    %c0_4 = arith.constant 0 : index
    %3 = vector.load %arg3[%c0_3, %c0_4] : memref<512x128xf32, #tpu.memory_space<vmem>>, vector<512x128xf32>
    tpu.vector_store %arg3[%c0_3, %c0_4], %2 {strides = array<i32>} : memref<512x128xf32, #tpu.memory_space<vmem>>, vector<512x128xf32>,
    return
  }
  func.func @transform_0(%arg0: i32) -> (i32, i32) {
    %c0_i32 = arith.constant 0 : i32
    %c0_i32_0 = arith.constant 0 : i32
    return %arg0, %c0_i32 : i32, i32
  }
  func.func @transform_1(%arg0: i32) -> (i32, i32) {
    %c0_i32 = arith.constant 0 : i32
    %c0_i32_0 = arith.constant 0 : i32
    %c0_i32_1 = arith.constant 0 : i32
    return %c0_i32, %c0_i32_0 : i32, i32
  }
  func.func @transform_2(%arg0: i32) -> (i32, i32) {
    %c0_i32 = arith.constant 0 : i32
    %c0_i32_0 = arith.constant 0 : i32
    return %arg0, %c0_i32 : i32, i32
  }
}

</mosaic_0001>

<llo_original>
// kernel: tpu_custom_call.1
$region0: #{tpu_custom_call.1}
  #allocation0 [shape = 'u32[]', space=smem, size = 0x4, offset = 0x4, fixed_abs, tag = 'smem constant byte address 0x4 - core index']
  #allocation1 [shape = 'u32[144,128]{1,0:T(1,128)}', space=vmem, size = 0x12000, scoped, tag = 'internal scratch']
  %s0 = inlined_call_operand.vmem [shape: f32[512,40], index: 0, kind: input, shape index: {}]
  %s1 = inlined_call_operand.vmem [shape: f32[40,128], index: 1, kind: input, shape index: {}]
  %s2 = inlined_call_operand.hbm [shape: f32[512,128], index: 2, kind: output, shape index: {}]
  %s3 = sld [smem:[#allocation0]]
  $region18: #{tpu_custom_call.1} parent=0
    _
  %s5 = ssub.s32 1, %s3
  %s6 = scalar_select 0, %s5, %s3
  $region1: #{tpu_custom_call.1} parent=0
    #allocation2 [shape = 'u8[262144]{0}', space=vmem, size = 0x40000, scoped, tag = 'output window, operand 0, single buffered']
    #allocation3 [shape = 's32[1]{0}', space=sflag, size = 0x4, scoped, tag = 'scoped memory for tpu_custom_call.1']
    %7 = vsyncpa [#allocation3], 0
    // Predicated region
    $region2: #{tpu_custom_call.1} parent=1 // pred_check
      _
    $region3: #{tpu_custom_call.1} parent=1 // pred_check_branch
      %9 = sbr.rel (0) target = $region5
    $region4: #{tpu_custom_call.1} parent=1 // pred_region
      _
    $region5: #{tpu_custom_call.1} parent=1 // pred_fallthru
      _
    // Predicated region
    $region6: #{tpu_custom_call.1} parent=1 // pred_check
      _
    $region7: #{tpu_custom_call.1} parent=1 // pred_check_branch
      %11 = sbr.rel (0) target = $region9
    $region8: #{tpu_custom_call.1} parent=1 // pred_region
      _
    $region9: #{tpu_custom_call.1} parent=1 // pred_fallthru
      _
    %v12 = vld [vmem:[%s0] sm:$0xff]
    %v13 = vld [vmem:[%s0 + $0x8] sm:$0xff]
    %v14 = vld [vmem:[%s0 + $0x10] sm:$0xff]
    %v15 = vld [vmem:[%s0 + $0x18] sm:$0xff]
    %v16 = vld [vmem:[%s0 + $0x20] sm:$0xff]
    %v17 = vld [vmem:[%s0 + $0x28] sm:$0xff]
    %v18 = vld [vmem:[%s0 + $0x30] sm:$0xff]
    %v19 = vld [vmem:[%s0 + $0x38] sm:$0xff]
    %v20 = vld [vmem:[%s0 + $0x40] sm:$0xff]
    %v21 = vld [vmem:[%s0 + $0x48] sm:$0xff]
    %v22 = vld [vmem:[%s0 + $0x50] sm:$0xff]
    %v23 = vld [vmem:[%s0 + $0x58] sm:$0xff]
    %v24 = vld [vmem:[%s0 + $0x60] sm:$0xff]
    %v25 = vld [vmem:[%s0 + $0x68] sm:$0xff]
    %v26 = vld [vmem:[%s0 + $0x70] sm:$0xff]
    %v27 = vld [vmem:[%s0 + $0x78] sm:$0xff]
    %v28 = vld [vmem:[%s0 + $0x80] sm:$0xff]
    %v29 = vld [vmem:[%s0 + $0x88] sm:$0xff]
    %v30 = vld [vmem:[%s0 + $0x90] sm:$0xff]
    %v31 = vld [vmem:[%s0 + $0x98] sm:$0xff]
    %v32 = vld [vmem:[%s0 + $0xa0] sm:$0xff]
    %v33 = vld [vmem:[%s0 + $0xa8] sm:$0xff]
    %v34 = vld [vmem:[%s0 + $0xb0] sm:$0xff]
    %v35 = vld [vmem:[%s0 + $0xb8] sm:$0xff]
    %v36 = vld [vmem:[%s0 + $0xc0] sm:$0xff]
    %v37 = vld [vmem:[%s0 + $0xc8] sm:$0xff]
    %v38 = vld [vmem:[%s0 + $0xd0] sm:$0xff]
    %v39 = vld [vmem:[%s0 + $0xd8] sm:$0xff]
    %v40 = vld [vmem:[%s0 + $0xe0] sm:$0xff]
    %v41 = vld [vmem:[%s0 + $0xe8] sm:$0xff]
    %v42 = vld [vmem:[%s0 + $0xf0] sm:$0xff]
    %v43 = vld [vmem:[%s0 + $0xf8] sm:$0xff]
    %v44 = vld [vmem:[%s0 + $0x100] sm:$0xff]
    %v45 = vld [vmem:[%s0 + $0x108] sm:$0xff]
    %v46 = vld [vmem:[%s0 + $0x110] sm:$0xff]
    %v47 = vld [vmem:[%s0 + $0x118] sm:$0xff]
    %v48 = vld [vmem:[%s0 + $0x120] sm:$0xff]
    %v49 = vld [vmem:[%s0 + $0x128] sm:$0xff]
    %v50 = vld [vmem:[%s0 + $0x130] sm:$0xff]
    %v51 = vld [vmem:[%s0 + $0x138] sm:$0xff]
    %v52 = vld [vmem:[%s0 + $0x140] sm:$0xff]
    %v53 = vld [vmem:[%s0 + $0x148] sm:$0xff]
    %v54 = vld [vmem:[%s0 + $0x150] sm:$0xff]
    %v55 = vld [vmem:[%s0 + $0x158] sm:$0xff]
    %v56 = vld [vmem:[%s0 + $0x160] sm:$0xff]
    %v57 = vld [vmem:[%s0 + $0x168] sm:$0xff]
    %v58 = vld [vmem:[%s0 + $0x170] sm:$0xff]
    %v59 = vld [vmem:[%s0 + $0x178] sm:$0xff]
    %v60 = vld [vmem:[%s0 + $0x180] sm:$0xff]
    %v61 = vld [vmem:[%s0 + $0x188] sm:$0xff]
    %v62 = vld [vmem:[%s0 + $0x190] sm:$0xff]
    %v63 = vld [vmem:[%s0 + $0x198] sm:$0xff]
    %v64 = vld [vmem:[%s0 + $0x1a0] sm:$0xff]
    %v65 = vld [vmem:[%s0 + $0x1a8] sm:$0xff]
    %v66 = vld [vmem:[%s0 + $0x1b0] sm:$0xff]
    %v67 = vld [vmem:[%s0 + $0x1b8] sm:$0xff]
    %v68 = vld [vmem:[%s0 + $0x1c0] sm:$0xff]
    %v69 = vld [vmem:[%s0 + $0x1c8] sm:$0xff]
    %v70 = vld [vmem:[%s0 + $0x1d0] sm:$0xff]
    %v71 = vld [vmem:[%s0 + $0x1d8] sm:$0xff]
    %v72 = vld [vmem:[%s0 + $0x1e0] sm:$0xff]
    %v73 = vld [vmem:[%s0 + $0x1e8] sm:$0xff]
    %v74 = vld [vmem:[%s0 + $0x1f0] sm:$0xff]
    %v75 = vld [vmem:[%s0 + $0x1f8] sm:$0xff]
    %v76 = vld [vmem:[%s1] sm:$0xff]
    %v77 = vld [vmem:[%s1 + $0x8] sm:$0xff]
    %v78 = vld [vmem:[%s1 + $0x10] sm:$0xff]
    %v79 = vld [vmem:[%s1 + $0x18] sm:$0xff]
    %v80 = vld [vmem:[%s1 + $0x20] sm:$0xff]
    %vm81 = vcmask 326656
    %v83 = vsel %vm81, %v12, 0
    %v86 = vsel %vm81, %v13, 0
    %v89 = vsel %vm81, %v14, 0
    %v92 = vsel %vm81, %v15, 0
    %v95 = vsel %vm81, %v16, 0
    %v98 = vsel %vm81, %v17, 0
    %v101 = vsel %vm81, %v18, 0
    %v104 = vsel %vm81, %v19, 0
    %v107 = vsel %vm81, %v20, 0
    %v110 = vsel %vm81, %v21, 0
    %v113 = vsel %vm81, %v22, 0
    %v116 = vsel %vm81, %v23, 0
    %v119 = vsel %vm81, %v24, 0
    %v122 = vsel %vm81, %v25, 0
    %v125 = vsel %vm81, %v26, 0
    %v128 = vsel %vm81, %v27, 0
    %v131 = vsel %vm81, %v28, 0
    %v134 = vsel %vm81, %v29, 0
    %v137 = vsel %vm81, %v30, 0
    %v140 = vsel %vm81, %v31, 0
    %v143 = vsel %vm81, %v32, 0
    %v146 = vsel %vm81, %v33, 0
    %v149 = vsel %vm81, %v34, 0
    %v152 = vsel %vm81, %v35, 0
    %v155 = vsel %vm81, %v36, 0
    %v158 = vsel %vm81, %v37, 0
    %v161 = vsel %vm81, %v38, 0
    %v164 = vsel %vm81, %v39, 0
    %v167 = vsel %vm81, %v40, 0
    %v170 = vsel %vm81, %v41, 0
    %v173 = vsel %vm81, %v42, 0
    %v176 = vsel %vm81, %v43, 0
    %v179 = vsel %vm81, %v44, 0
    %v182 = vsel %vm81, %v45, 0
    %v185 = vsel %vm81, %v46, 0
    %v188 = vsel %vm81, %v47, 0
    %v191 = vsel %vm81, %v48, 0
    %v194 = vsel %vm81, %v49, 0
    %v197 = vsel %vm81, %v50, 0
    %v200 = vsel %vm81, %v51, 0
    %v203 = vsel %vm81, %v52, 0
    %v206 = vsel %vm81, %v53, 0
    %v209 = vsel %vm81, %v54, 0
    %v212 = vsel %vm81, %v55, 0
    %v215 = vsel %vm81, %v56, 0
    %v218 = vsel %vm81, %v57, 0
    %v221 = vsel %vm81, %v58, 0
    %v224 = vsel %vm81, %v59, 0
    %v227 = vsel %vm81, %v60, 0
    %v230 = vsel %vm81, %v61, 0
    %v233 = vsel %vm81, %v62, 0
    %v236 = vsel %vm81, %v63, 0
    %v239 = vsel %vm81, %v64, 0
    %v242 = vsel %vm81, %v65, 0
    %v245 = vsel %vm81, %v66, 0
    %v248 = vsel %vm81, %v67, 0
    %v251 = vsel %vm81, %v68, 0
    %v254 = vsel %vm81, %v69, 0
    %v257 = vsel %vm81, %v70, 0
    %v260 = vsel %vm81, %v71, 0
    %v263 = vsel %vm81, %v72, 0
    %v266 = vsel %vm81, %v73, 0
    %v269 = vsel %vm81, %v74, 0
    %v272 = vsel %vm81, %v75, 0
    %274 = vmatprep.subr.mxu0 0.0
    %275 = vmatpush1.msra.mxu0 %v76
    %276 = vmatprep.subr.mxu0 0.0
    %277 = vmatpush1.msra.mxu0 %v77
    %278 = vmatprep.subr.mxu0 0.0
    %279 = vmatpush1.msra.mxu0 %v78
    %280 = vmatprep.subr.mxu0 0.0
    %281 = vmatpush1.msra.mxu0 %v79
    %282 = vmatprep.subr.mxu0 0.0
    %283 = vmatpush1.msra.mxu0 %v80
    %284 = vmatprep.subr.mxu0 0.0
    %285 = vmatpush1.msra.mxu0 0.0
    %286 = vmatprep.subr.mxu0 0.0
    %287 = vmatpush1.msra.mxu0 0.0
    %288 = vmatprep.subr.mxu0 0.0
    %289 = vmatpush1.msra.mxu0 0.0
    %290 = vmatprep.subr.mxu0 0.0
    %291 = vmatpush1.msra.mxu0 0.0
    %292 = vmatprep.subr.mxu0 0.0
    %293 = vmatpush1.msra.mxu0 0.0
    %294 = vmatprep.subr.mxu0 0.0
    %295 = vmatpush1.msra.mxu0 0.0
    %296 = vmatprep.subr.mxu0 0.0
    %297 = vmatpush1.msra.mxu0 0.0
    %298 = vmatprep.subr.mxu0 0.0
    %299 = vmatpush1.msra.mxu0 0.0
    %300 = vmatprep.subr.mxu0 0.0
    %301 = vmatpush1.msra.mxu0 0.0
    %302 = vmatprep.subr.mxu0 0.0
    %303 = vmatpush1.msra.mxu0 0.0
    %304 = vmatprep.subr.mxu0 0.0
    %305 = vmatpush1.msra.mxu0 0.0
    %306 = vmatprep.subr.mxu0 0.0
    %307 = vmatpush1.msra.mxu0 0.0
    %308 = vmatprep.subr.mxu0 0.0
    %309 = vmatpush1.msra.mxu0 0.0
    %310 = vmatprep.subr.mxu0 0.0
    %311 = vmatpush1.msra.mxu0 0.0
    %312 = vmatprep.subr.mxu0 0.0
    %313 = vmatpush1.msra.mxu0 0.0
    %314 = vmatprep.subr.mxu0 0.0
    %315 = vmatpush1.msra.mxu0 0.0
    %316 = vmatprep.subr.mxu0 0.0
    %317 = vmatpush1.msra.mxu0 0.0
    %318 = vmatprep.subr.mxu0 0.0
    %319 = vmatpush1.msra.mxu0 0.0
    %320 = vmatprep.subr.mxu0 0.0
    %321 = vmatpush1.msra.mxu0 0.0
    %322 = vmatprep.subr.mxu0 0.0
    %323 = vmatpush1.msra.mxu0 0.0
    %324 = vmatprep.subr.mxu0 0.0
    %325 = vmatpush1.msra.mxu0 0.0
    %326 = vmatprep.subr.mxu0 0.0
    %327 = vmatpush1.msra.mxu0 0.0
    %328 = vmatprep.subr.mxu0 0.0
    %329 = vmatpush1.msra.mxu0 0.0
    %330 = vmatprep.subr.mxu0 0.0
    %331 = vmatpush1.msra.mxu0 0.0
    %332 = vmatprep.subr.mxu0 0.0
    %333 = vmatpush1.msra.mxu0 0.0
    %334 = vmatprep.subr.mxu0 0.0
    %335 = vmatpush1.msra.mxu0 0.0
    %336 = vmatprep.subr.mxu0 0.0
    %337 = vmatpush1.msra.mxu0 0.0
    %338 = vmatprep.mubr.f32.mxu0 0.0
    %339 = vmatmul.mubr.f32.gmra.mrb[0].mxu0 %v83
    %v340 = vpop.f32.mrb[0].mxu0
    %v341 = vadd.f32 0.0, %v340
    %v342 = vpop.f32.mrb[0].mxu0
    %343 = vmatprep.mubr.f32.mxu0 0.0
    %344 = vmatmul.mubr.f32.gmra.mrb[0].mxu0 %v86
    %v345 = vpop.f32.mrb[0].mxu0
    %v346 = vadd.f32 0.0, %v345
    %v347 = vpop.f32.mrb[0].mxu0
    %348 = vmatprep.mubr.f32.mxu0 0.0
    %349 = vmatmul.mubr.f32.gmra.mrb[0].mxu0 %v89
    %v350 = vpop.f32.mrb[0].mxu0
    %v351 = vadd.f32 0.0, %v350
    %v352 = vpop.f32.mrb[0].mxu0
    %353 = vmatprep.mubr.f32.mxu0 0.0
    %354 = vmatmul.mubr.f32.gmra.mrb[0].mxu0 %v92
    %v355 = vpop.f32.mrb[0].mxu0
    %v356 = vadd.f32 0.0, %v355
    %v357 = vpop.f32.mrb[0].mxu0
    %358 = vmatprep.mubr.f32.mxu0 0.0
    %359 = vmatmul.mubr.f32.gmra.mrb[0].mxu0 %v95
    %v360 = vpop.f32.mrb[0].mxu0
    %v361 = vadd.f32 0.0, %v360
    %v362 = vpop.f32.mrb[0].mxu0
    %363 = vmatprep.mubr.f32.mxu0 0.0
    %364 = vmatmul.mubr.f32.gmra.mrb[0].mxu0 %v98
    %v365 = vpop.f32.mrb[0].mxu0
    %v366 = vadd.f32 0.0, %v365
    %v367 = vpop.f32.mrb[0].mxu0
    %368 = vmatprep.mubr.f32.mxu0 0.0
    %369 = vmatmul.mubr.f32.gmra.mrb[0].mxu0 %v101
    %v370 = vpop.f32.mrb[0].mxu0
    %v371 = vadd.f32 0.0, %v370
    %v372 = vpop.f32.mrb[0].mxu0
    %373 = vmatprep.mubr.f32.mxu0 0.0
    %374 = vmatmul.mubr.f32.gmra.mrb[0].mxu0 %v104
    %v375 = vpop.f32.mrb[0].mxu0
    %v376 = vadd.f32 0.0, %v375
    %v377 = vpop.f32.mrb[0].mxu0
    %378 = vmatprep.mubr.f32.mxu0 0.0
    %379 = vmatmul.mubr.f32.gmra.mrb[0].mxu0 %v107
    %v380 = vpop.f32.mrb[0].mxu0
    %v381 = vadd.f32 0.0, %v380
    %v382 = vpop.f32.mrb[0].mxu0
    %383 = vmatprep.mubr.f32.mxu0 0.0
    %384 = vmatmul.mubr.f32.gmra.mrb[0].mxu0 %v110
    %v385 = vpop.f32.mrb[0].mxu0
    %v386 = vadd.f32 0.0, %v385
    %v387 = vpop.f32.mrb[0].mxu0
    %388 = vmatprep.mubr.f32.mxu0 0.0
    %389 = vmatmul.mubr.f32.gmra.mrb[0].mxu0 %v113
    %v390 = vpop.f32.mrb[0].mxu0
    %v391 = vadd.f32 0.0, %v390
    %v392 = vpop.f32.mrb[0].mxu0
    %393 = vmatprep.mubr.f32.mxu0 0.0
    %394 = vmatmul.mubr.f32.gmra.mrb[0].mxu0 %v116
    %v395 = vpop.f32.mrb[0].mxu0
    %v396 = vadd.f32 0.0, %v395
    %v397 = vpop.f32.mrb[0].mxu0
    %398 = vmatprep.mubr.f32.mxu0 0.0
    %399 = vmatmul.mubr.f32.gmra.mrb[0].mxu0 %v119
    %v400 = vpop.f32.mrb[0].mxu0
    %v401 = vadd.f32 0.0, %v400
    %v402 = vpop.f32.mrb[0].mxu0
    %403 = vmatprep.mubr.f32.mxu0 0.0
    %404 = vmatmul.mubr.f32.gmra.mrb[0].mxu0 %v122
    %v405 = vpop.f32.mrb[0].mxu0
    %v406 = vadd.f32 0.0, %v405
    %v407 = vpop.f32.mrb[0].mxu0
    %408 = vmatprep.mubr.f32.mxu0 0.0
    %409 = vmatmul.mubr.f32.gmra.mrb[0].mxu0 %v125
    %v410 = vpop.f32.mrb[0].mxu0
    %v411 = vadd.f32 0.0, %v410
    %v412 = vpop.f32.mrb[0].mxu0
    %413 = vmatprep.mubr.f32.mxu0 0.0
    %414 = vmatmul.mubr.f32.gmra.mrb[0].mxu0 %v128
    %v415 = vpop.f32.mrb[0].mxu0
    %v416 = vadd.f32 0.0, %v415
    %v417 = vpop.f32.mrb[0].mxu0
    %418 = vmatprep.mubr.f32.mxu0 0.0
    %419 = vmatmul.mubr.f32.gmra.mrb[0].mxu0 %v131
    %v420 = vpop.f32.mrb[0].mxu0
    %v421 = vadd.f32 0.0, %v420
    %v422 = vpop.f32.mrb[0].mxu0
    %423 = vmatprep.mubr.f32.mxu0 0.0
    %424 = vmatmul.mubr.f32.gmra.mrb[0].mxu0 %v134
    %v425 = vpop.f32.mrb[0].mxu0
    %v426 = vadd.f32 0.0, %v425
    %v427 = vpop.f32.mrb[0].mxu0
    %428 = vmatprep.mubr.f32.mxu0 0.0
    %429 = vmatmul.mubr.f32.gmra.mrb[0].mxu0 %v137
    %v430 = vpop.f32.mrb[0].mxu0
    %v431 = vadd.f32 0.0, %v430
    %v432 = vpop.f32.mrb[0].mxu0
    %433 = vmatprep.mubr.f32.mxu0 0.0
    %434 = vmatmul.mubr.f32.gmra.mrb[0].mxu0 %v140
    %v435 = vpop.f32.mrb[0].mxu0
    %v436 = vadd.f32 0.0, %v435
    %v437 = vpop.f32.mrb[0].mxu0
    %438 = vmatprep.mubr.f32.mxu0 0.0
    %439 = vmatmul.mubr.f32.gmra.mrb[0].mxu0 %v143
    %v440 = vpop.f32.mrb[0].mxu0
    %v441 = vadd.f32 0.0, %v440
    %v442 = vpop.f32.mrb[0].mxu0
    %443 = vmatprep.mubr.f32.mxu0 0.0
    %444 = vmatmul.mubr.f32.gmra.mrb[0].mxu0 %v146
    %v445 = vpop.f32.mrb[0].mxu0
    %v446 = vadd.f32 0.0, %v445
    %v447 = vpop.f32.mrb[0].mxu0
    %448 = vmatprep.mubr.f32.mxu0 0.0
    %449 = vmatmul.mubr.f32.gmra.mrb[0].mxu0 %v149
    %v450 = vpop.f32.mrb[0].mxu0
    %v451 = vadd.f32 0.0, %v450
    %v452 = vpop.f32.mrb[0].mxu0
    %453 = vmatprep.mubr.f32.mxu0 0.0
    %454 = vmatmul.mubr.f32.gmra.mrb[0].mxu0 %v152
    %v455 = vpop.f32.mrb[0].mxu0
    %v456 = vadd.f32 0.0, %v455
    %v457 = vpop.f32.mrb[0].mxu0
    %458 = vmatprep.mubr.f32.mxu0 0.0
    %459 = vmatmul.mubr.f32.gmra.mrb[0].mxu0 %v155
    %v460 = vpop.f32.mrb[0].mxu0
    %v461 = vadd.f32 0.0, %v460
    %v462 = vpop.f32.mrb[0].mxu0
    %463 = vmatprep.mubr.f32.mxu0 0.0
    %464 = vmatmul.mubr.f32.gmra.mrb[0].mxu0 %v158
    %v465 = vpop.f32.mrb[0].mxu0
    %v466 = vadd.f32 0.0, %v465
    %v467 = vpop.f32.mrb[0].mxu0
    %468 = vmatprep.mubr.f32.mxu0 0.0
    %469 = vmatmul.mubr.f32.gmra.mrb[0].mxu0 %v161
    %v470 = vpop.f32.mrb[0].mxu0
    %v471 = vadd.f32 0.0, %v470
    %v472 = vpop.f32.mrb[0].mxu0
    %473 = vmatprep.mubr.f32.mxu0 0.0
    %474 = vmatmul.mubr.f32.gmra.mrb[0].mxu0 %v164
    %v475 = vpop.f32.mrb[0].mxu0
    %v476 = vadd.f32 0.0, %v475
    %v477 = vpop.f32.mrb[0].mxu0
    %478 = vmatprep.mubr.f32.mxu0 0.0
    %479 = vmatmul.mubr.f32.gmra.mrb[0].mxu0 %v167
    %v480 = vpop.f32.mrb[0].mxu0
    %v481 = vadd.f32 0.0, %v480
    %v482 = vpop.f32.mrb[0].mxu0
    %483 = vmatprep.mubr.f32.mxu0 0.0
    %484 = vmatmul.mubr.f32.gmra.mrb[0].mxu0 %v170
    %v485 = vpop.f32.mrb[0].mxu0
    %v486 = vadd.f32 0.0, %v485
    %v487 = vpop.f32.mrb[0].mxu0
    %488 = vmatprep.mubr.f32.mxu0 0.0
    %489 = vmatmul.mubr.f32.gmra.mrb[0].mxu0 %v173
    %v490 = vpop.f32.mrb[0].mxu0
    %v491 = vadd.f32 0.0, %v490
    %v492 = vpop.f32.mrb[0].mxu0
    %493 = vmatprep.mubr.f32.mxu0 0.0
    %494 = vmatmul.mubr.f32.gmra.mrb[0].mxu0 %v176
    %v495 = vpop.f32.mrb[0].mxu0
    %v496 = vadd.f32 0.0, %v495
    %v497 = vpop.f32.mrb[0].mxu0
    %498 = vmatprep.mubr.f32.mxu0 0.0
    %499 = vmatmul.mubr.f32.gmra.mrb[0].mxu0 %v179
    %v500 = vpop.f32.mrb[0].mxu0
    %v501 = vadd.f32 0.0, %v500
    %v502 = vpop.f32.mrb[0].mxu0
    %503 = vmatprep.mubr.f32.mxu0 0.0
    %504 = vmatmul.mubr.f32.gmra.mrb[0].mxu0 %v182
    %v505 = vpop.f32.mrb[0].mxu0
    %v506 = vadd.f32 0.0, %v505
    %v507 = vpop.f32.mrb[0].mxu0
    %508 = vmatprep.mubr.f32.mxu0 0.0
    %509 = vmatmul.mubr.f32.gmra.mrb[0].mxu0 %v185
    %v510 = vpop.f32.mrb[0].mxu0
    %v511 = vadd.f32 0.0, %v510
    %v512 = vpop.f32.mrb[0].mxu0
    %513 = vmatprep.mubr.f32.mxu0 0.0
    %514 = vmatmul.mubr.f32.gmra.mrb[0].mxu0 %v188
    %v515 = vpop.f32.mrb[0].mxu0
    %v516 = vadd.f32 0.0, %v515
    %v517 = vpop.f32.mrb[0].mxu0
    %518 = vmatprep.mubr.f32.mxu0 0.0
    %519 = vmatmul.mubr.f32.gmra.mrb[0].mxu0 %v191
    %v520 = vpop.f32.mrb[0].mxu0
    %v521 = vadd.f32 0.0, %v520
    %v522 = vpop.f32.mrb[0].mxu0
    %523 = vmatprep.mubr.f32.mxu0 0.0
    %524 = vmatmul.mubr.f32.gmra.mrb[0].mxu0 %v194
    %v525 = vpop.f32.mrb[0].mxu0
    %v526 = vadd.f32 0.0, %v525
    %v527 = vpop.f32.mrb[0].mxu0
    %528 = vmatprep.mubr.f32.mxu0 0.0
    %529 = vmatmul.mubr.f32.gmra.mrb[0].mxu0 %v197
    %v530 = vpop.f32.mrb[0].mxu0
    %v531 = vadd.f32 0.0, %v530
    %v532 = vpop.f32.mrb[0].mxu0
    %533 = vmatprep.mubr.f32.mxu0 0.0
    %534 = vmatmul.mubr.f32.gmra.mrb[0].mxu0 %v200
    %v535 = vpop.f32.mrb[0].mxu0
    %v536 = vadd.f32 0.0, %v535
    %v537 = vpop.f32.mrb[0].mxu0
    %538 = vmatprep.mubr.f32.mxu0 0.0
    %539 = vmatmul.mubr.f32.gmra.mrb[0].mxu0 %v203
    %v540 = vpop.f32.mrb[0].mxu0
    %v541 = vadd.f32 0.0, %v540
    %v542 = vpop.f32.mrb[0].mxu0
    %543 = vmatprep.mubr.f32.mxu0 0.0
    %544 = vmatmul.mubr.f32.gmra.mrb[0].mxu0 %v206
    %v545 = vpop.f32.mrb[0].mxu0
    %v546 = vadd.f32 0.0, %v545
    %v547 = vpop.f32.mrb[0].mxu0
    %548 = vmatprep.mubr.f32.mxu0 0.0
    %549 = vmatmul.mubr.f32.gmra.mrb[0].mxu0 %v209
    %v550 = vpop.f32.mrb[0].mxu0
    %v551 = vadd.f32 0.0, %v550
    %v552 = vpop.f32.mrb[0].mxu0
    %553 = vmatprep.mubr.f32.mxu0 0.0
    %554 = vmatmul.mubr.f32.gmra.mrb[0].mxu0 %v212
    %v555 = vpop.f32.mrb[0].mxu0
    %v556 = vadd.f32 0.0, %v555
    %v557 = vpop.f32.mrb[0].mxu0
    %558 = vmatprep.mubr.f32.mxu0 0.0
    %559 = vmatmul.mubr.f32.gmra.mrb[0].mxu0 %v215
    %v560 = vpop.f32.mrb[0].mxu0
    %v561 = vadd.f32 0.0, %v560
    %v562 = vpop.f32.mrb[0].mxu0
    %563 = vmatprep.mubr.f32.mxu0 0.0
    %564 = vmatmul.mubr.f32.gmra.mrb[0].mxu0 %v218
    %v565 = vpop.f32.mrb[0].mxu0
    %v566 = vadd.f32 0.0, %v565
    %v567 = vpop.f32.mrb[0].mxu0
    %568 = vmatprep.mubr.f32.mxu0 0.0
    %569 = vmatmul.mubr.f32.gmra.mrb[0].mxu0 %v221
    %v570 = vpop.f32.mrb[0].mxu0
    %v571 = vadd.f32 0.0, %v570
    %v572 = vpop.f32.mrb[0].mxu0
    %573 = vmatprep.mubr.f32.mxu0 0.0
    %574 = vmatmul.mubr.f32.gmra.mrb[0].mxu0 %v224
    %v575 = vpop.f32.mrb[0].mxu0
    %v576 = vadd.f32 0.0, %v575
    %v577 = vpop.f32.mrb[0].mxu0
    %578 = vmatprep.mubr.f32.mxu0 0.0
    %579 = vmatmul.mubr.f32.gmra.mrb[0].mxu0 %v227
    %v580 = vpop.f32.mrb[0].mxu0
    %v581 = vadd.f32 0.0, %v580
    %v582 = vpop.f32.mrb[0].mxu0
    %583 = vmatprep.mubr.f32.mxu0 0.0
    %584 = vmatmul.mubr.f32.gmra.mrb[0].mxu0 %v230
    %v585 = vpop.f32.mrb[0].mxu0
    %v586 = vadd.f32 0.0, %v585
    %v587 = vpop.f32.mrb[0].mxu0
    %588 = vmatprep.mubr.f32.mxu0 0.0
    %589 = vmatmul.mubr.f32.gmra.mrb[0].mxu0 %v233
    %v590 = vpop.f32.mrb[0].mxu0
    %v591 = vadd.f32 0.0, %v590
    %v592 = vpop.f32.mrb[0].mxu0
    %593 = vmatprep.mubr.f32.mxu0 0.0
    %594 = vmatmul.mubr.f32.gmra.mrb[0].mxu0 %v236
    %v595 = vpop.f32.mrb[0].mxu0
    %v596 = vadd.f32 0.0, %v595
    %v597 = vpop.f32.mrb[0].mxu0
    %598 = vmatprep.mubr.f32.mxu0 0.0
    %599 = vmatmul.mubr.f32.gmra.mrb[0].mxu0 %v239
    %v600 = vpop.f32.mrb[0].mxu0
    %v601 = vadd.f32 0.0, %v600
    %v602 = vpop.f32.mrb[0].mxu0
    %603 = vmatprep.mubr.f32.mxu0 0.0
    %604 = vmatmul.mubr.f32.gmra.mrb[0].mxu0 %v242
    %v605 = vpop.f32.mrb[0].mxu0
    %v606 = vadd.f32 0.0, %v605
    %v607 = vpop.f32.mrb[0].mxu0
    %608 = vmatprep.mubr.f32.mxu0 0.0
    %609 = vmatmul.mubr.f32.gmra.mrb[0].mxu0 %v245
    %v610 = vpop.f32.mrb[0].mxu0
    %v611 = vadd.f32 0.0, %v610
    %v612 = vpop.f32.mrb[0].mxu0
    %613 = vmatprep.mubr.f32.mxu0 0.0
    %614 = vmatmul.mubr.f32.gmra.mrb[0].mxu0 %v248
    %v615 = vpop.f32.mrb[0].mxu0
    %v616 = vadd.f32 0.0, %v615
    %v617 = vpop.f32.mrb[0].mxu0
    %618 = vmatprep.mubr.f32.mxu0 0.0
    %619 = vmatmul.mubr.f32.gmra.mrb[0].mxu0 %v251
    %v620 = vpop.f32.mrb[0].mxu0
    %v621 = vadd.f32 0.0, %v620
    %v622 = vpop.f32.mrb[0].mxu0
    %623 = vmatprep.mubr.f32.mxu0 0.0
    %624 = vmatmul.mubr.f32.gmra.mrb[0].mxu0 %v254
    %v625 = vpop.f32.mrb[0].mxu0
    %v626 = vadd.f32 0.0, %v625
    %v627 = vpop.f32.mrb[0].mxu0
    %628 = vmatprep.mubr.f32.mxu0 0.0
    %629 = vmatmul.mubr.f32.gmra.mrb[0].mxu0 %v257
    %v630 = vpop.f32.mrb[0].mxu0
    %v631 = vadd.f32 0.0, %v630
    %v632 = vpop.f32.mrb[0].mxu0
    %633 = vmatprep.mubr.f32.mxu0 0.0
    %634 = vmatmul.mubr.f32.gmra.mrb[0].mxu0 %v260
    %v635 = vpop.f32.mrb[0].mxu0
    %v636 = vadd.f32 0.0, %v635
    %v637 = vpop.f32.mrb[0].mxu0
    %638 = vmatprep.mubr.f32.mxu0 0.0
    %639 = vmatmul.mubr.f32.gmra.mrb[0].mxu0 %v263
    %v640 = vpop.f32.mrb[0].mxu0
    %v641 = vadd.f32 0.0, %v640
    %v642 = vpop.f32.mrb[0].mxu0
    %643 = vmatprep.mubr.f32.mxu0 0.0
    %644 = vmatmul.mubr.f32.gmra.mrb[0].mxu0 %v266
    %v645 = vpop.f32.mrb[0].mxu0
    %v646 = vadd.f32 0.0, %v645
    %v647 = vpop.f32.mrb[0].mxu0
    %648 = vmatprep.mubr.f32.mxu0 0.0
    %649 = vmatmul.mubr.f32.gmra.mrb[0].mxu0 %v269
    %v650 = vpop.f32.mrb[0].mxu0
    %v651 = vadd.f32 0.0, %v650
    %v652 = vpop.f32.mrb[0].mxu0
    %653 = vmatprep.mubr.f32.mxu0 0.0
    %654 = vmatmul.mubr.f32.gmra.mrb[0].mxu0 %v272
    %v655 = vpop.f32.mrb[0].mxu0
    %v656 = vadd.f32 0.0, %v655
    %v657 = vpop.f32.mrb[0].mxu0
    %658 = vdwg.mxu0
    %659 = vst [vmem:[#allocation2] sm:$0xff] %v341
    %660 = vst [vmem:[#allocation2 + $0x8] sm:$0xff] %v346
    %661 = vst [vmem:[#allocation2 + $0x10] sm:$0xff] %v351
    %662 = vst [vmem:[#allocation2 + $0x18] sm:$0xff] %v356
    %663 = vst [vmem:[#allocation2 + $0x20] sm:$0xff] %v361
    %664 = vst [vmem:[#allocation2 + $0x28] sm:$0xff] %v366
    %665 = vst [vmem:[#allocation2 + $0x30] sm:$0xff] %v371
    %666 = vst [vmem:[#allocation2 + $0x38] sm:$0xff] %v376
    %667 = vst [vmem:[#allocation2 + $0x40] sm:$0xff] %v381
    %668 = vst [vmem:[#allocation2 + $0x48] sm:$0xff] %v386
    %669 = vst [vmem:[#allocation2 + $0x50] sm:$0xff] %v391
    %670 = vst [vmem:[#allocation2 + $0x58] sm:$0xff] %v396
    %671 = vst [vmem:[#allocation2 + $0x60] sm:$0xff] %v401
    %672 = vst [vmem:[#allocation2 + $0x68] sm:$0xff] %v406
    %673 = vst [vmem:[#allocation2 + $0x70] sm:$0xff] %v411
    %674 = vst [vmem:[#allocation2 + $0x78] sm:$0xff] %v416
    %675 = vst [vmem:[#allocation2 + $0x80] sm:$0xff] %v421
    %676 = vst [vmem:[#allocation2 + $0x88] sm:$0xff] %v426
    %677 = vst [vmem:[#allocation2 + $0x90] sm:$0xff] %v431
    %678 = vst [vmem:[#allocation2 + $0x98] sm:$0xff] %v436
    %679 = vst [vmem:[#allocation2 + $0xa0] sm:$0xff] %v441
    %680 = vst [vmem:[#allocation2 + $0xa8] sm:$0xff] %v446
    %681 = vst [vmem:[#allocation2 + $0xb0] sm:$0xff] %v451
    %682 = vst [vmem:[#allocation2 + $0xb8] sm:$0xff] %v456
    %683 = vst [vmem:[#allocation2 + $0xc0] sm:$0xff] %v461
    %684 = vst [vmem:[#allocation2 + $0xc8] sm:$0xff] %v466
    %685 = vst [vmem:[#allocation2 + $0xd0] sm:$0xff] %v471
    %686 = vst [vmem:[#allocation2 + $0xd8] sm:$0xff] %v476
    %687 = vst [vmem:[#allocation2 + $0xe0] sm:$0xff] %v481
    %688 = vst [vmem:[#allocation2 + $0xe8] sm:$0xff] %v486
    %689 = vst [vmem:[#allocation2 + $0xf0] sm:$0xff] %v491
    %690 = vst [vmem:[#allocation2 + $0xf8] sm:$0xff] %v496
    %691 = vst [vmem:[#allocation2 + $0x100] sm:$0xff] %v501
    %692 = vst [vmem:[#allocation2 + $0x108] sm:$0xff] %v506
    %693 = vst [vmem:[#allocation2 + $0x110] sm:$0xff] %v511
    %694 = vst [vmem:[#allocation2 + $0x118] sm:$0xff] %v516
    %695 = vst [vmem:[#allocation2 + $0x120] sm:$0xff] %v521
    %696 = vst [vmem:[#allocation2 + $0x128] sm:$0xff] %v526
    %697 = vst [vmem:[#allocation2 + $0x130] sm:$0xff] %v531
    %698 = vst [vmem:[#allocation2 + $0x138] sm:$0xff] %v536
    %699 = vst [vmem:[#allocation2 + $0x140] sm:$0xff] %v541
    %700 = vst [vmem:[#allocation2 + $0x148] sm:$0xff] %v546
    %701 = vst [vmem:[#allocation2 + $0x150] sm:$0xff] %v551
    %702 = vst [vmem:[#allocation2 + $0x158] sm:$0xff] %v556
    %703 = vst [vmem:[#allocation2 + $0x160] sm:$0xff] %v561
    %704 = vst [vmem:[#allocation2 + $0x168] sm:$0xff] %v566
    %705 = vst [vmem:[#allocation2 + $0x170] sm:$0xff] %v571
    %706 = vst [vmem:[#allocation2 + $0x178] sm:$0xff] %v576
    %707 = vst [vmem:[#allocation2 + $0x180] sm:$0xff] %v581
    %708 = vst [vmem:[#allocation2 + $0x188] sm:$0xff] %v586
    %709 = vst [vmem:[#allocation2 + $0x190] sm:$0xff] %v591
    %710 = vst [vmem:[#allocation2 + $0x198] sm:$0xff] %v596
    %711 = vst [vmem:[#allocation2 + $0x1a0] sm:$0xff] %v601
    %712 = vst [vmem:[#allocation2 + $0x1a8] sm:$0xff] %v606
    %713 = vst [vmem:[#allocation2 + $0x1b0] sm:$0xff] %v611
    %714 = vst [vmem:[#allocation2 + $0x1b8] sm:$0xff] %v616
    %715 = vst [vmem:[#allocation2 + $0x1c0] sm:$0xff] %v621
    %716 = vst [vmem:[#allocation2 + $0x1c8] sm:$0xff] %v626
    %717 = vst [vmem:[#allocation2 + $0x1d0] sm:$0xff] %v631
    %718 = vst [vmem:[#allocation2 + $0x1d8] sm:$0xff] %v636
    %719 = vst [vmem:[#allocation2 + $0x1e0] sm:$0xff] %v641
    %720 = vst [vmem:[#allocation2 + $0x1e8] sm:$0xff] %v646
    %721 = vst [vmem:[#allocation2 + $0x1f0] sm:$0xff] %v651
    %722 = vst [vmem:[#allocation2 + $0x1f8] sm:$0xff] %v656
    // Predicated region
    $region10: #{tpu_custom_call.1} parent=1 // pred_check
      _
    $region11: #{tpu_custom_call.1} parent=1 // pred_check_branch
      %724 = sbr.rel (0) target = $region13
    $region12: #{tpu_custom_call.1} parent=1 // pred_region
      %s726 = ssub.s32 8192, 8192
      %727 = vsyncadd [#allocation3], %s726
      %s728 = sshll.u32 [#allocation2], 4
      %s729 = int_to_ptr.vmem [resolvable:$true] %s728
      %734 = dma.vmem_to_hbm [thread:$0]  %s729, 8192, %s2, [#allocation3], 128, 128, 8
    $region13: #{tpu_custom_call.1} parent=1 // pred_fallthru
      _
    // Predicated region
    $region14: #{tpu_custom_call.1} parent=1 // pred_check
      _
    $region15: #{tpu_custom_call.1} parent=1 // pred_check_branch
      %736 = sbr.rel (0) target = $region17
    $region16: #{tpu_custom_call.1} parent=1 // pred_region
      %737 = dma.done [#allocation3], 8192
    $region17: #{tpu_custom_call.1} parent=1 // pred_fallthru
      _
    %738 = vsyncpa [#allocation3], 1

</llo_original>
